<compile_context>
chip_gen: v5e
topology: v5e:2x2
jax: 0.10.0
libtpu: 0.0.40
codegen_flags: <defaults>
</compile_context>

<pallas_src>
import functools

import jax
import jax.numpy as jnp
from jax.experimental import pallas as pl
from jax.experimental.pallas import tpu as pltpu

LANE = 128       # vreg lane width
SUB = 16         # batch-tile sublane granularity (bf16 packing: 16 rows / vreg)
NEG_BIG = -1e30  # bias for padded logit columns -> exp underflows to 0


def _round_up(x, m):
    return (x + m - 1) // m * m


def policy_mlp_kernel(x_ref, w1_ref, b1_ref, w2_ref, b2_ref, w3_ref, b3_ref,
                      o_ref):
    """One batch tile of the fused forward pass.

    x_ref:  (TB, in_dim)  bf16, true (unpadded) feature width
    w*_ref: bf16 weights, hidden/output dims zero-padded to 128 lanes (resident)
    b*_ref: f32 biases; padded fc3 columns hold -1e30 (vanish under softmax)
    o_ref:  (TB, out_dim) f32, true (unpadded) output width
    """
    out_dim = o_ref.shape[-1]

    # fc1 + tanh (bf16 MXU operands, f32 accumulation)
    h1 = jnp.tanh(
        jnp.dot(x_ref[...], w1_ref[...], preferred_element_type=jnp.float32)
        + b1_ref[...])

    # fc2 + tanh
    h2 = jnp.tanh(
        jnp.dot(h1.astype(jnp.bfloat16), w2_ref[...],
                preferred_element_type=jnp.float32)
        + b2_ref[...])

    # fc3 logits, 128-lane padded; padded columns carry a -1e30 bias.
    # Invariant: real logits stay finite and padded bias columns are never
    # overwritten, so they contribute exactly 0 to the softmax.
    logits = (jnp.dot(h2.astype(jnp.bfloat16), w3_ref[...],
                      preferred_element_type=jnp.float32)
              + b3_ref[...])

    # Numerically-stable softmax: max/sum reductions over the lane-dense 128-wide
    # tile (padded columns exp to 0). Exact division keeps each row summing to 1
    # at f32 precision (safe for sampling / log-prob downstream).
    m = jnp.max(logits, axis=-1, keepdims=True)
    e = jnp.exp(logits - m)
    denom = jnp.sum(e, axis=-1, keepdims=True)
    p = e[:, :out_dim] / denom

    # Only the true output columns are stored (narrow masked store; negligible
    # cost vs. the 16x output-bandwidth saved relative to a 128-padded store).
    o_ref[...] = p.astype(o_ref.dtype)


def prepare_params(w1, b1, w2, b2, w3, b3):
    """Pad hidden/output dims to 128 lanes and cast weights to bf16 ONCE.

    Call at parameter-init time; pass the result to policy_network_forward so the
    per-call path carries no padding / casting ops.
    w*: [fan_in, fan_out] f32 (already transposed vs. nn.Linear), b*: [1, fan_out].
    """
    in_dim, hid = w1.shape
    out_dim = int(w3.shape[1])
    Hp = _round_up(hid, LANE)
    Op = _round_up(out_dim, LANE)

    w1_p = jnp.zeros((in_dim, Hp), jnp.bfloat16).at[:, :hid].set(
        w1.astype(jnp.bfloat16))
    b1_p = jnp.zeros((1, Hp), jnp.float32).at[:, :hid].set(b1)
    w2_p = jnp.zeros((Hp, Hp), jnp.bfloat16).at[:hid, :hid].set(
        w2.astype(jnp.bfloat16))
    b2_p = jnp.zeros((1, Hp), jnp.float32).at[:, :hid].set(b2)
    w3_p = jnp.zeros((Hp, Op), jnp.bfloat16).at[:hid, :out_dim].set(
        w3.astype(jnp.bfloat16))
    # Padded logit columns get a huge negative bias -> zero probability.
    b3_p = jnp.full((1, Op), NEG_BIG, jnp.float32).at[:, :out_dim].set(b3)

    return (w1_p, b1_p, w2_p, b2_p, w3_p, b3_p), out_dim


@functools.partial(jax.jit, static_argnames=("out_dim", "block_b"))
def policy_network_forward(x, params, *, out_dim, block_b=1024):
    """x: [B, in_dim] f32. Returns [B, out_dim] f32 softmax probabilities."""
    w1_p, b1_p, w2_p, b2_p, w3_p, b3_p = params
    B, in_dim = x.shape
    Hp = w1_p.shape[1]
    Op = w3_p.shape[1]

    # bf16 activations on the wire: halves x DMA, matches the bf16 MXU operands.
    x = x.astype(jnp.bfloat16)

    # Batch tile: multiple of 16 (bf16 sublane packing), large enough to amortize
    # the ~0.35 us per-grid-step overhead; working set stays in the low 100s of
    # KiB, far under the scoped-VMEM default on v5e/v6e/v7x (no vmem bump needed).
    TB = max(SUB, _round_up(min(block_b, B), SUB))
    Bp = _round_up(B, TB)
    # v7x: if the grid would have a single step but there is enough work, halve
    # the tile so the "parallel" batch axis spans both TensorCores.
    if Bp // TB < 2 and Bp >= 2 * SUB:
        TB = _round_up(pl.cdiv(Bp, 2), SUB)
        Bp = _round_up(B, TB)

    if Bp != B:
        x = jnp.zeros((Bp, in_dim), x.dtype).at[:B].set(x)

    grid = (Bp // TB,)

    cost = pl.CostEstimate(
        flops=2 * B * (in_dim * Hp + Hp * Hp + Hp * Op),
        transcendentals=B * (Hp + Hp + Op),
        bytes_accessed=(x.size * 2 + B * out_dim * 4
                        + (w1_p.size + w2_p.size + w3_p.size) * 2
                        + (b1_p.size + b2_p.size + b3_p.size) * 4),
    )

    out = pl.pallas_call(
        policy_mlp_kernel,
        out_shape=jax.ShapeDtypeStruct((Bp, out_dim), jnp.float32),
        grid=grid,
        in_specs=[
            # x tile: pipelined along the batch grid, TRUE (unpadded) width.
            pl.BlockSpec((TB, in_dim), lambda i: (i, 0)),
            # weights / biases: resident across the grid (constant index_map).
            pl.BlockSpec((in_dim, Hp), lambda i: (0, 0)),   # w1
            pl.BlockSpec((1, Hp), lambda i: (0, 0)),        # b1
            pl.BlockSpec((Hp, Hp), lambda i: (0, 0)),       # w2
            pl.BlockSpec((1, Hp), lambda i: (0, 0)),        # b2
            pl.BlockSpec((Hp, Op), lambda i: (0, 0)),       # w3
            pl.BlockSpec((1, Op), lambda i: (0, 0)),        # b3
        ],
        # Output at TRUE width: no padded write, no post-kernel column slice.
        out_specs=pl.BlockSpec((TB, out_dim), lambda i: (i, 0)),
        compiler_params=pltpu.CompilerParams(
            dimension_semantics=("parallel",)),
        cost_estimate=cost,
    )(x, w1_p, b1_p, w2_p, b2_p, w3_p, b3_p)

    return out if Bp == B else out[:B]


def init_linear(key, fan_in, fan_out):
    """Deterministic init mimicking nn.Linear's U(-1/sqrt(fan_in), 1/sqrt(fan_in)).

    Weight returned already transposed to [fan_in, fan_out]; bias as [1, fan_out].
    """
    kw, kb = jax.random.split(key)
    bound = 1.0 / jnp.sqrt(fan_in)
    w = jax.random.uniform(kw, (fan_in, fan_out), jnp.float32, -bound, bound)
    b = jax.random.uniform(kb, (1, fan_out), jnp.float32, -bound, bound)
    return w, b


def reference_forward(x, w1, b1, w2, b2, w3, b3):
    """Pure-JAX f32 reference matching the PyTorch module semantics."""
    h1 = jnp.tanh(x @ w1 + b1)
    h2 = jnp.tanh(h1 @ w2 + b2)
    logits = h2 @ w3 + b3
    return jax.nn.softmax(logits, axis=-1)


if __name__ == "__main__":
    # Small shapes consistent with the module: batch=8, input_dim=16,
    # hidden_dim=64 (module default), output_dim=8.
    B, input_dim, hidden_dim, output_dim = 8, 16, 64, 8

    key = jax.random.PRNGKey(0)
    kx, k1, k2, k3 = jax.random.split(key, 4)

    x = jax.random.normal(kx, (B, input_dim), jnp.float32)
    w1, b1 = init_linear(k1, input_dim, hidden_dim)
    w2, b2 = init_linear(k2, hidden_dim, hidden_dim)
    w3, b3 = init_linear(k3, hidden_dim, output_dim)

    # Pad / cast parameters once (outside the per-call path).
    params, out_dim = prepare_params(w1, b1, w2, b2, w3, b3)

    out = policy_network_forward(x, params, out_dim=out_dim)
    out = jax.block_until_ready(out)

    ref = reference_forward(x, w1, b1, w2, b2, w3, b3)
    assert out.shape == (B, output_dim)
    # Exact softmax division -> rows sum to 1 at f32 precision.
    assert jnp.allclose(jnp.sum(out, axis=-1), 1.0, atol=1e-4)
    # bf16 MXU operands -> looser tolerance vs the f32 reference.
    assert jnp.allclose(out, ref, atol=2e-2, rtol=2e-2)

    print("KERNEL_OK")
</pallas_src>

<mosaic_0001>
module attributes {stable_mosaic.version = 11 : i64} {
  func.func @policy_mlp_kernel(%arg0: i32, %arg1: memref<16x16xbf16, #tpu.memory_space<vmem>>, %arg2: memref<16x128xbf16, #tpu.memory_space<vmem>>, %arg3: memref<1x128xf32, #tpu.memory_space<vmem>>, %arg4: memref<128x128xbf16, #tpu.memory_space<vmem>>, %arg5: memref<1x128xf32, #tpu.memory_space<vmem>>, %arg6: memref<128x128xbf16, #tpu.memory_space<vmem>>, %arg7: memref<1x128xf32, #tpu.memory_space<vmem>>, %arg8: memref<16x8xf32, #tpu.memory_space<vmem>>) attributes {dimension_semantics = [#tpu.dimension_semantics<parallel>], iteration_bounds = array<i64: 1>, scalar_prefetch = 0 : i64, scratch_operands = 0 : i64, tpu.core_type = #tpu.core_type<tc>, window_params = [{transform_indices = @transform_0, window_bounds = array<i64: 16, 16>}, {pipeline_mode = #tpu.pipeline_mode<synchronous>, transform_indices = @transform_1, window_bounds = array<i64: 16, 128>}, {pipeline_mode = #tpu.pipeline_mode<synchronous>, transform_indices = @transform_2, window_bounds = array<i64: 1, 128>}, {pipeline_mode = #tpu.pipeline_mode<synchronous>, transform_indices = @transform_3, window_bounds = array<i64: 128, 128>}, {pipeline_mode = #tpu.pipeline_mode<synchronous>, transform_indices = @transform_4, window_bounds = array<i64: 1, 128>}, {pipeline_mode = #tpu.pipeline_mode<synchronous>, transform_indices = @transform_5, window_bounds = array<i64: 128, 128>}, {pipeline_mode = #tpu.pipeline_mode<synchronous>, transform_indices = @transform_6, window_bounds = array<i64: 1, 128>}, {transform_indices = @transform_7, window_bounds = array<i64: 16, 8>}]} {
    %c0 = arith.constant 0 : index
    %c0_0 = arith.constant 0 : index
    %0 = vector.load %arg1[%c0, %c0_0] : memref<16x16xbf16, #tpu.memory_space<vmem>>, vector<16x16xbf16>
    %c0_1 = arith.constant 0 : index
    %c0_2 = arith.constant 0 : index
    %1 = vector.load %arg2[%c0_1, %c0_2] : memref<16x128xbf16, #tpu.memory_space<vmem>>, vector<16x128xbf16>
    %cst = arith.constant dense<0.000000e+00> : vector<16x128xf32>
    %2 = tpu.matmul %0, %1, %cst {dimension_numbers = #tpu.dot_dimension_numbers<[1], [0], [0], [1], [0, 0, 1, 1], [], []>} : vector<16x16xbf16>, vector<16x128xbf16>, vector<16x128xf32> -> vector<16x128xf32>
    %c0_3 = arith.constant 0 : index
    %c0_4 = arith.constant 0 : index
    %3 = vector.load %arg3[%c0_3, %c0_4] : memref<1x128xf32, #tpu.memory_space<vmem>>, vector<1x128xf32>
    %4 = vector.broadcast %3 : vector<1x128xf32> to vector<16x128xf32>
    %5 = arith.addf %2, %4 : vector<16x128xf32>
    %6 = math.tanh %5 : vector<16x128xf32>
    %7 = arith.truncf %6 : vector<16x128xf32> to vector<16x128xbf16>
    %c0_5 = arith.constant 0 : index
    %c0_6 = arith.constant 0 : index
    %8 = vector.load %arg4[%c0_5, %c0_6] : memref<128x128xbf16, #tpu.memory_space<vmem>>, vector<128x128xbf16>
    %cst_7 = arith.constant dense<0.000000e+00> : vector<16x128xf32>
    %9 = tpu.matmul %7, %8, %cst_7 {dimension_numbers = #tpu.dot_dimension_numbers<[1], [0], [0], [1], [0, 0, 1, 1], [], []>} : vector<16x128xbf16>, vector<128x128xbf16>, vector<16x128xf32> -> vector<16x128xf32>
    %c0_8 = arith.constant 0 : index
    %c0_9 = arith.constant 0 : index
    %10 = vector.load %arg5[%c0_8, %c0_9] : memref<1x128xf32, #tpu.memory_space<vmem>>, vector<1x128xf32>
    %11 = vector.broadcast %10 : vector<1x128xf32> to vector<16x128xf32>
    %12 = arith.addf %9, %11 : vector<16x128xf32>
    %13 = math.tanh %12 : vector<16x128xf32>
    %14 = arith.truncf %13 : vector<16x128xf32> to vector<16x128xbf16>
    %c0_10 = arith.constant 0 : index
    %c0_11 = arith.constant 0 : index
    %15 = vector.load %arg6[%c0_10, %c0_11] : memref<128x128xbf16, #tpu.memory_space<vmem>>, vector<128x128xbf16>
    %cst_12 = arith.constant dense<0.000000e+00> : vector<16x128xf32>
    %16 = tpu.matmul %14, %15, %cst_12 {dimension_numbers = #tpu.dot_dimension_numbers<[1], [0], [0], [1], [0, 0, 1, 1], [], []>} : vector<16x128xbf16>, vector<128x128xbf16>, vector<16x128xf32> -> vector<16x128xf32>
    %c0_13 = arith.constant 0 : index
    %c0_14 = arith.constant 0 : index
    %17 = vector.load %arg7[%c0_13, %c0_14] : memref<1x128xf32, #tpu.memory_space<vmem>>, vector<1x128xf32>
    %18 = vector.broadcast %17 : vector<1x128xf32> to vector<16x128xf32>
    %19 = arith.addf %16, %18 : vector<16x128xf32>
    %cst_15 = arith.constant dense<0xFF800000> : vector<16xf32>
    %20 = vector.multi_reduction <maximumf>, %19, %cst_15 [1] : vector<16x128xf32> to vector<16xf32>
    %21 = vector.shape_cast %20 : vector<16xf32> to vector<16x1xf32>
    %22 = vector.broadcast %21 : vector<16x1xf32> to vector<16x128xf32>
    %23 = arith.subf %19, %22 : vector<16x128xf32>
    %24 = math.exp %23 : vector<16x128xf32>
    %cst_16 = arith.constant dense<0.000000e+00> : vector<16xf32>
    %25 = vector.multi_reduction <add>, %24, %cst_16 [1] : vector<16x128xf32> to vector<16xf32>
    %26 = vector.shape_cast %25 : vector<16xf32> to vector<16x1xf32>
    %27 = vector.extract_strided_slice %24 {offsets = [0, 0], sizes = [16, 8], strides = [1, 1]} : vector<16x128xf32> to vector<16x8xf32>
    %28 = vector.broadcast %26 : vector<16x1xf32> to vector<16x8xf32>
    %29 = arith.divf %27, %28 : vector<16x8xf32>
    %c0_17 = arith.constant 0 : index
    %c0_18 = arith.constant 0 : index
    %30 = vector.load %arg8[%c0_17, %c0_18] : memref<16x8xf32, #tpu.memory_space<vmem>>, vector<16x8xf32>
    tpu.vector_store %arg8[%c0_17, %c0_18], %29 {strides = array<i32>} : memref<16x8xf32, #tpu.memory_space<vmem>>, vector<16x8xf32>,
    return
  }
  func.func @transform_0(%arg0: i32) -> (i32, i32) {
    %c0_i32 = arith.constant 0 : i32
    %c0_i32_0 = arith.constant 0 : i32
    return %arg0, %c0_i32 : i32, i32
  }
  func.func @transform_1(%arg0: i32) -> (i32, i32) {
    %c0_i32 = arith.constant 0 : i32
    %c0_i32_0 = arith.constant 0 : i32
    %c0_i32_1 = arith.constant 0 : i32
    return %c0_i32, %c0_i32_0 : i32, i32
  }
  func.func @transform_2(%arg0: i32) -> (i32, i32) {
    %c0_i32 = arith.constant 0 : i32
    %c0_i32_0 = arith.constant 0 : i32
    %c0_i32_1 = arith.constant 0 : i32
    return %c0_i32, %c0_i32_0 : i32, i32
  }
  func.func @transform_3(%arg0: i32) -> (i32, i32) {
    %c0_i32 = arith.constant 0 : i32
    %c0_i32_0 = arith.constant 0 : i32
    %c0_i32_1 = arith.constant 0 : i32
    return %c0_i32, %c0_i32_0 : i32, i32
  }
  func.func @transform_4(%arg0: i32) -> (i32, i32) {
    %c0_i32 = arith.constant 0 : i32
    %c0_i32_0 = arith.constant 0 : i32
    %c0_i32_1 = arith.constant 0 : i32
    return %c0_i32, %c0_i32_0 : i32, i32
  }
  func.func @transform_5(%arg0: i32) -> (i32, i32) {
    %c0_i32 = arith.constant 0 : i32
    %c0_i32_0 = arith.constant 0 : i32
    %c0_i32_1 = arith.constant 0 : i32
    return %c0_i32, %c0_i32_0 : i32, i32
  }
  func.func @transform_6(%arg0: i32) -> (i32, i32) {
    %c0_i32 = arith.constant 0 : i32
    %c0_i32_0 = arith.constant 0 : i32
    %c0_i32_1 = arith.constant 0 : i32
    return %c0_i32, %c0_i32_0 : i32, i32
  }
  func.func @transform_7(%arg0: i32) -> (i32, i32) {
    %c0_i32 = arith.constant 0 : i32
    %c0_i32_0 = arith.constant 0 : i32
    return %arg0, %c0_i32 : i32, i32
  }
}

</mosaic_0001>

<llo_original>
// kernel: policy_network_forward.1
$region0: #{policy_network_forward.1}
  #allocation0 [shape = 'u32[]', space=smem, size = 0x4, offset = 0x4, fixed_abs, tag = 'smem constant byte address 0x4 - core index']
  #allocation1 [shape = 'u32[72,128]{1,0:T(1,128)}', space=vmem, size = 0x9000, scoped, tag = 'internal scratch']
  %s0 = inlined_call_operand.vmem [shape: bf16[16,16], index: 0, kind: input, shape index: {}]
  %s1 = inlined_call_operand.vmem [shape: bf16[16,128], index: 1, kind: input, shape index: {}]
  %s2 = inlined_call_operand.vmem [shape: f32[1,128], index: 2, kind: input, shape index: {}]
  %s3 = inlined_call_operand.hbm [shape: bf16[128,128], index: 3, kind: input, shape index: {}]
  %s4 = inlined_call_operand.vmem [shape: f32[1,128], index: 4, kind: input, shape index: {}]
  %s5 = inlined_call_operand.hbm [shape: bf16[128,128], index: 5, kind: input, shape index: {}]
  %s6 = inlined_call_operand.vmem [shape: f32[1,128], index: 6, kind: input, shape index: {}]
  %s7 = inlined_call_operand.vmem [shape: f32[16,8], index: 7, kind: output, shape index: {}]
  %s8 = sld [smem:[#allocation0]]
  $region46: #{policy_network_forward.1} parent=0
    _
  %s10 = ssub.s32 1, %s8
  %s11 = scalar_select 0, %s10, %s8
  $region1: #{policy_network_forward.1} parent=0
    #allocation2 [shape = 'u8[32768]{0}', space=vmem, size = 0x8000, scoped, tag = 'input window, operand 3, single buffered']
    #allocation3 [shape = 's32[1]{0}', space=sflag, size = 0x4, scoped, tag = 'scoped memory for policy_network_forward.1']
    #allocation4 [shape = 'u8[32768]{0}', space=vmem, size = 0x8000, scoped, tag = 'input window, operand 5, single buffered']
    #allocation5 [shape = 's32[1]{0}', space=sflag, size = 0x4, scoped, tag = 'scoped memory for policy_network_forward.1']
    %12 = vsyncpa [#allocation3], 0
    %13 = vsyncpa [#allocation5], 0
    // Predicated region
    $region2: #{policy_network_forward.1} parent=1 // pred_check
      _
    $region3: #{policy_network_forward.1} parent=1 // pred_check_branch
      %15 = sbr.rel (0) target = $region5
    $region4: #{policy_network_forward.1} parent=1 // pred_region
      _
    $region5: #{policy_network_forward.1} parent=1 // pred_fallthru
      _
    // Predicated region
    $region6: #{policy_network_forward.1} parent=1 // pred_check
      _
    $region7: #{policy_network_forward.1} parent=1 // pred_check_branch
      %17 = sbr.rel (0) target = $region9
    $region8: #{policy_network_forward.1} parent=1 // pred_region
      _
    $region9: #{policy_network_forward.1} parent=1 // pred_fallthru
      _
    // Predicated region
    $region10: #{policy_network_forward.1} parent=1 // pred_check
      _
    $region11: #{policy_network_forward.1} parent=1 // pred_check_branch
      %19 = sbr.rel (0) target = $region13
    $region12: #{policy_network_forward.1} parent=1 // pred_region
      _
    $region13: #{policy_network_forward.1} parent=1 // pred_fallthru
      _
    // Predicated region
    $region14: #{policy_network_forward.1} parent=1 // pred_check
      _
    $region15: #{policy_network_forward.1} parent=1 // pred_check_branch
      %21 = sbr.rel (0) target = $region17
    $region16: #{policy_network_forward.1} parent=1 // pred_region
      %23 = vsyncadd [#allocation3], 0
      %s24 = sshll.u32 %s3, 4
      %s25 = int_to_ptr.hbm [resolvable:$true] %s24
      %s26 = sshll.u32 [#allocation2], 4
      %s27 = int_to_ptr.vmem [resolvable:$true] %s26
      %32 = dma.hbm_to_vmem [thread:$0]  %s25, 1024, %s27, [#allocation3], 64, 64, 4
    $region17: #{policy_network_forward.1} parent=1 // pred_fallthru
      _
    // Predicated region
    $region18: #{policy_network_forward.1} parent=1 // pred_check
      _
    $region19: #{policy_network_forward.1} parent=1 // pred_check_branch
      %34 = sbr.rel (0) target = $region21
    $region20: #{policy_network_forward.1} parent=1 // pred_region
      _
    $region21: #{policy_network_forward.1} parent=1 // pred_fallthru
      _
    // Predicated region
    $region22: #{policy_network_forward.1} parent=1 // pred_check
      _
    $region23: #{policy_network_forward.1} parent=1 // pred_check_branch
      %36 = sbr.rel (0) target = $region25
    $region24: #{policy_network_forward.1} parent=1 // pred_region
      %38 = vsyncadd [#allocation5], 0
      %s39 = sshll.u32 %s5, 4
      %s40 = int_to_ptr.hbm [resolvable:$true] %s39
      %s41 = sshll.u32 [#allocation4], 4
      %s42 = int_to_ptr.vmem [resolvable:$true] %s41
      %47 = dma.hbm_to_vmem [thread:$0]  %s40, 1024, %s42, [#allocation5], 64, 64, 4
    $region25: #{policy_network_forward.1} parent=1 // pred_fallthru
      _
    // Predicated region
    $region26: #{policy_network_forward.1} parent=1 // pred_check
      _
    $region27: #{policy_network_forward.1} parent=1 // pred_check_branch
      %49 = sbr.rel (0) target = $region29
    $region28: #{policy_network_forward.1} parent=1 // pred_region
      _
    $region29: #{policy_network_forward.1} parent=1 // pred_fallthru
      _
    // Predicated region
    $region30: #{policy_network_forward.1} parent=1 // pred_check
      _
    $region31: #{policy_network_forward.1} parent=1 // pred_check_branch
      %51 = sbr.rel (0) target = $region33
    $region32: #{policy_network_forward.1} parent=1 // pred_region
      %53 = dma.done [#allocation3], 1024
    $region33: #{policy_network_forward.1} parent=1 // pred_fallthru
      _
    // Predicated region
    $region34: #{policy_network_forward.1} parent=1 // pred_check
      _
    $region35: #{policy_network_forward.1} parent=1 // pred_check_branch
      %55 = sbr.rel (0) target = $region37
    $region36: #{policy_network_forward.1} parent=1 // pred_region
      %57 = dma.done [#allocation5], 1024
    $region37: #{policy_network_forward.1} parent=1 // pred_fallthru
      _
    %v59 = vld [vmem:[%s0] sm:$0xf]
    %v60 = vld [vmem:[%s0 + $0x4] sm:$0xf]
    %v61 = vld [vmem:[%s1] sm:$0xf]
    %v62 = vld [vmem:[%s1 + $0x4] sm:$0xf]
    %v63 = vld [vmem:[%s2] sm:$0x1]
    %v65 = vperm.slane %v63, 0
    %v69 = vunpack.c.l.b16 %v59
    %v70 = vunpack.c.l.b16 %v60
    %v71 = vpack.c.b16 %v70, %v69
    %v74 = vunpack.c.l.b16 %v61
    %v75 = vunpack.c.l.b16 %v62
    %v76 = vpack.c.b16 %v75, %v74
    %vm78 = vcmask 130048
    %v80 = vsel %vm78, %v71, 0
    %82 = vmatpush.bf16.msra.mxu0 0
    %83 = vmatpush.bf16.msra.mxu0 0
    %84 = vmatpush.bf16.msra.mxu0 0
    %85 = vmatpush.bf16.msra.mxu0 0
    %86 = vmatpush.bf16.msra.mxu0 0
    %87 = vmatpush.bf16.msra.mxu0 0
    %88 = vmatpush.bf16.msra.mxu0 0
    %89 = vmatpush.bf16.msra.mxu0 %v76
    %90 = vmatmul.bf16.gmra.mxu0 %v80
    %v91 = vpop.f32.mrf.mxu0
    %v92 = vadd.f32 %v65, %v91
    %v93 = vpop.f32.mrf.mxu0
    %v94 = vadd.f32 %v65, %v93
    %95 = vdwg.mxu0
    %v96 = vtanh.pop %v92
    %v97 = vtanh.pop %v94
    %v98 = vpack.c.bf16 %v97, %v96
    %v99 = vld [vmem:[#allocation2] sm:$0xf]
    %v100 = vld [vmem:[#allocation2 + $0x4] sm:$0xf]
    %v101 = vld [vmem:[#allocation2 + $0x8] sm:$0xf]
    %v102 = vld [vmem:[#allocation2 + $0xc] sm:$0xf]
    %v103 = vld [vmem:[#allocation2 + $0x10] sm:$0xf]
    %v104 = vld [vmem:[#allocation2 + $0x14] sm:$0xf]
    %v105 = vld [vmem:[#allocation2 + $0x18] sm:$0xf]
    %v106 = vld [vmem:[#allocation2 + $0x1c] sm:$0xf]
    %v107 = vld [vmem:[#allocation2 + $0x20] sm:$0xf]
    %v108 = vld [vmem:[#allocation2 + $0x24] sm:$0xf]
    %v109 = vld [vmem:[#allocation2 + $0x28] sm:$0xf]
    %v110 = vld [vmem:[#allocation2 + $0x2c] sm:$0xf]
    %v111 = vld [vmem:[#allocation2 + $0x30] sm:$0xf]
    %v112 = vld [vmem:[#allocation2 + $0x34] sm:$0xf]
    %v113 = vld [vmem:[#allocation2 + $0x38] sm:$0xf]
    %v114 = vld [vmem:[#allocation2 + $0x3c] sm:$0xf]
    %v115 = vld [vmem:[%s4] sm:$0x1]
    %v117 = vperm.slane %v115, 0
    %v135 = vunpack.c.l.b16 %v99
    %v136 = vunpack.c.l.b16 %v100
    %v137 = vunpack.c.l.b16 %v101
    %v138 = vunpack.c.l.b16 %v102
    %v139 = vunpack.c.l.b16 %v103
    %v140 = vunpack.c.l.b16 %v104
    %v141 = vunpack.c.l.b16 %v105
    %v142 = vunpack.c.l.b16 %v106
    %v143 = vunpack.c.l.b16 %v107
    %v144 = vunpack.c.l.b16 %v108
    %v145 = vunpack.c.l.b16 %v109
    %v146 = vunpack.c.l.b16 %v110
    %v147 = vunpack.c.l.b16 %v111
    %v148 = vunpack.c.l.b16 %v112
    %v149 = vunpack.c.l.b16 %v113
    %v150 = vunpack.c.l.b16 %v114
    %v151 = vpack.c.b16 %v136, %v135
    %v152 = vpack.c.b16 %v138, %v137
    %v153 = vpack.c.b16 %v140, %v139
    %v154 = vpack.c.b16 %v142, %v141
    %v155 = vpack.c.b16 %v144, %v143
    %v156 = vpack.c.b16 %v146, %v145
    %v157 = vpack.c.b16 %v148, %v147
    %v158 = vpack.c.b16 %v150, %v149
    %167 = vmatpush.bf16.msra.mxu0 %v158
    %168 = vmatpush.bf16.msra.mxu0 %v157
    %169 = vmatpush.bf16.msra.mxu0 %v156
    %170 = vmatpush.bf16.msra.mxu0 %v155
    %171 = vmatpush.bf16.msra.mxu0 %v154
    %172 = vmatpush.bf16.msra.mxu0 %v153
    %173 = vmatpush.bf16.msra.mxu0 %v152
    %174 = vmatpush.bf16.msra.mxu0 %v151
    %175 = vmatmul.bf16.gmra.mxu0 %v98
    %v176 = vpop.f32.mrf.mxu0
    %v177 = vadd.f32 %v117, %v176
    %v178 = vpop.f32.mrf.mxu0
    %v179 = vadd.f32 %v117, %v178
    %180 = vdwg.mxu0
    %v181 = vtanh.pop %v177
    %v182 = vtanh.pop %v179
    %v183 = vpack.c.bf16 %v182, %v181
    %v184 = vld [vmem:[#allocation4] sm:$0xf]
    %v185 = vld [vmem:[#allocation4 + $0x4] sm:$0xf]
    %v186 = vld [vmem:[#allocation4 + $0x8] sm:$0xf]
    %v187 = vld [vmem:[#allocation4 + $0xc] sm:$0xf]
    %v188 = vld [vmem:[#allocation4 + $0x10] sm:$0xf]
    %v189 = vld [vmem:[#allocation4 + $0x14] sm:$0xf]
    %v190 = vld [vmem:[#allocation4 + $0x18] sm:$0xf]
    %v191 = vld [vmem:[#allocation4 + $0x1c] sm:$0xf]
    %v192 = vld [vmem:[#allocation4 + $0x20] sm:$0xf]
    %v193 = vld [vmem:[#allocation4 + $0x24] sm:$0xf]
    %v194 = vld [vmem:[#allocation4 + $0x28] sm:$0xf]
    %v195 = vld [vmem:[#allocation4 + $0x2c] sm:$0xf]
    %v196 = vld [vmem:[#allocation4 + $0x30] sm:$0xf]
    %v197 = vld [vmem:[#allocation4 + $0x34] sm:$0xf]
    %v198 = vld [vmem:[#allocation4 + $0x38] sm:$0xf]
    %v199 = vld [vmem:[#allocation4 + $0x3c] sm:$0xf]
    %v200 = vld [vmem:[%s6] sm:$0x1]
    %v202 = vperm.slane %v200, 0
    %v220 = vunpack.c.l.b16 %v184
    %v221 = vunpack.c.l.b16 %v185
    %v222 = vunpack.c.l.b16 %v186
    %v223 = vunpack.c.l.b16 %v187
    %v224 = vunpack.c.l.b16 %v188
    %v225 = vunpack.c.l.b16 %v189
    %v226 = vunpack.c.l.b16 %v190
    %v227 = vunpack.c.l.b16 %v191
    %v228 = vunpack.c.l.b16 %v192
    %v229 = vunpack.c.l.b16 %v193
    %v230 = vunpack.c.l.b16 %v194
    %v231 = vunpack.c.l.b16 %v195
    %v232 = vunpack.c.l.b16 %v196
    %v233 = vunpack.c.l.b16 %v197
    %v234 = vunpack.c.l.b16 %v198
    %v235 = vunpack.c.l.b16 %v199
    %v236 = vpack.c.b16 %v221, %v220
    %v237 = vpack.c.b16 %v223, %v222
    %v238 = vpack.c.b16 %v225, %v224
    %v239 = vpack.c.b16 %v227, %v226
    %v240 = vpack.c.b16 %v229, %v228
    %v241 = vpack.c.b16 %v231, %v230
    %v242 = vpack.c.b16 %v233, %v232
    %v243 = vpack.c.b16 %v235, %v234
    %252 = vmatpush.bf16.msra.mxu0 %v243
    %253 = vmatpush.bf16.msra.mxu0 %v242
    %254 = vmatpush.bf16.msra.mxu0 %v241
    %255 = vmatpush.bf16.msra.mxu0 %v240
    %256 = vmatpush.bf16.msra.mxu0 %v239
    %257 = vmatpush.bf16.msra.mxu0 %v238
    %258 = vmatpush.bf16.msra.mxu0 %v237
    %259 = vmatpush.bf16.msra.mxu0 %v236
    %260 = vmatmul.bf16.gmra.mxu0 %v183
    %v261 = vpop.f32.mrf.mxu0
    %v262 = vadd.f32 %v202, %v261
    %v263 = vpop.f32.mrf.mxu0
    %v264 = vadd.f32 %v202, %v263
    %265 = vdwg.mxu0
    %266 = vmax.xlane.f32.xlu0 %v262
    %v267 = vpop.xlane.xlu0 %266
    %268 = vmax.xlane.f32.xlu0 %v264
    %v269 = vpop.xlane.xlu0 %268
    %v270 = vsub.f32 %v262, %v267
    %v271 = vsub.f32 %v264, %v269
    %v272 = vmul.f32 %v270, 1.442695
    %v273 = vpow.pop %v272
    %v274 = vmul.f32 %v271, 1.442695
    %v275 = vpow.pop %v274
    %276 = vadd.xlane.f32.xlu0 %v273
    %v277 = vpop.xlane.xlu0 %276
    %278 = vadd.xlane.f32.xlu0 %v275
    %v279 = vpop.xlane.xlu0 %278
    %v280 = vrcp.pop %v277
    %v281 = vmul.f32 %v277, %v280
    %v282 = vsub.f32 1.0, %v281
    %v283 = vmul.f32 %v280, %v282
    %v284 = vadd.f32 %v280, %v283
    %vm285 = vweird.f32 %v277
    %vm286 = vweird.f32 %v280
    %vm287 = vmor %vm285, %vm286
    %v288 = vsel %vm287, %v280, %v284
    %v289 = vand.u32 2147483647, %v277
    %vm290 = vcmp.eq.f32.partialorder %v289, 8.507059e+37
    %v291 = vand.u32 %v277, 2147483648
    %v292 = vor.u32 1.1754944e-38, %v291
    %v293 = vsel %vm290, %v292, %v288
    %v294 = vmul.f32 %v273, %v293
    %v295 = vrcp.pop %v279
    %v296 = vmul.f32 %v279, %v295
    %v297 = vsub.f32 1.0, %v296
    %v298 = vmul.f32 %v295, %v297
    %v299 = vadd.f32 %v295, %v298
    %vm300 = vweird.f32 %v279
    %vm301 = vweird.f32 %v295
    %vm302 = vmor %vm300, %vm301
    %v303 = vsel %vm302, %v295, %v299
    %v304 = vand.u32 2147483647, %v279
    %vm305 = vcmp.eq.f32.partialorder %v304, 8.507059e+37
    %v306 = vand.u32 %v279, 2147483648
    %v307 = vor.u32 1.1754944e-38, %v306
    %v308 = vsel %vm305, %v307, %v303
    %v309 = vmul.f32 %v275, %v308
    %vm310 = vcmask 64512
    %311 = vst.msk [vmem:[%s7] sm:$0xff] %vm310, %v294
    %312 = vst.msk [vmem:[%s7 + $0x8] sm:$0xff] %vm310, %v309
    // Predicated region
    $region38: #{policy_network_forward.1} parent=1 // pred_check
      _
    $region39: #{policy_network_forward.1} parent=1 // pred_check_branch
      %314 = sbr.rel (0) target = $region41
    $region40: #{policy_network_forward.1} parent=1 // pred_region
      _
    $region41: #{policy_network_forward.1} parent=1 // pred_fallthru
      _
    // Predicated region
    $region42: #{policy_network_forward.1} parent=1 // pred_check
      _
    $region43: #{policy_network_forward.1} parent=1 // pred_check_branch
      %316 = sbr.rel (0) target = $region45
    $region44: #{policy_network_forward.1} parent=1 // pred_region
      _
    $region45: #{policy_network_forward.1} parent=1 // pred_fallthru
      _
    %317 = vsyncpa [#allocation3], 1
    %318 = vsyncpa [#allocation5], 1

</llo_original>
